<compile_context>
chip_gen: v7x
topology: tpu7x:2x2x1
jax: 0.10.0
libtpu: 0.0.40
codegen_flags: <defaults>
</compile_context>

<pallas_src>
import functools
import math

import jax
import jax.numpy as jnp
from jax.experimental import pallas as pl
from jax.experimental.pallas import tpu as pltpu

LN_EPS = 1e-5
N_PAD = 128                      # lane-dense padded output width
_MIB = 1024 * 1024


def _round_up(n, m):
    return ((n + m - 1) // m) * m


def _vmem_capacity_bytes():
    try:
        return int(pltpu.get_tpu_info().vmem_capacity_bytes)
    except Exception:
        return 128 * _MIB        # v5e/v6e physical; conservative default


def yesno_head_kernel(x_ref, w1_ref, b1_ref, gamma_ref, beta_ref,
                      w2_ref, b2_ref, o_ref, *, true_h, approximate_gelu):
    # ---- Linear 1: (tb, D) @ (D, Hp) + b1 on the MXU, f32 accumulate ----
    h = jnp.dot(x_ref[...], w1_ref[...], preferred_element_type=jnp.float32)
    h = h + b1_ref[...].astype(jnp.float32)

    # ---- LayerNorm over the true hidden width, single statistics sweep ----
    # Padded hidden columns are exactly zero (zero W1 cols / zero b1), so sums
    # over the padded width equal sums over the true width.
    inv_h = 1.0 / float(true_h)
    mean = jnp.sum(h, axis=-1, keepdims=True) * inv_h
    mean_sq = jnp.sum(h * h, axis=-1, keepdims=True) * inv_h
    var = jnp.maximum(mean_sq - mean * mean, 0.0)
    h = (h - mean) * jax.lax.rsqrt(var + LN_EPS)
    # gamma/beta are zero-padded, so padded columns return to exactly zero.
    h = h * gamma_ref[...].astype(jnp.float32) + beta_ref[...].astype(jnp.float32)

    # ---- GELU (exact erf matches nn.GELU(); tanh variant goes to the EUP) ----
    if approximate_gelu:
        h = jax.nn.gelu(h, approximate=True)
    else:
        h = 0.5 * h * (1.0 + jax.lax.erf(h * (1.0 / math.sqrt(2.0))))

    # TODO(synk): Dropout omitted (inference-mode identity); a training-mode
    # mask would use pltpu.prng_seed / pltpu.prng_random_bits.

    # ---- Linear 2: (tb, Hp) @ (Hp, 128) + b2, lane-dense store ----
    w2 = w2_ref[...]
    out = jnp.dot(h.astype(w2.dtype), w2, preferred_element_type=jnp.float32)
    out = out + b2_ref[...].astype(jnp.float32)
    o_ref[...] = out.astype(o_ref.dtype)


def _pick_row_tile(B, D, Hp, x_itemsize, w_itemsize, vmem_cap, block_b):
    """Generation-aware row tile: fit resident weights + streams in VMEM."""
    if block_b is None:
        resident = (D * Hp + Hp * N_PAD + 3 * Hp + N_PAD) * w_itemsize
        avail = max(vmem_cap - resident - 8 * _MIB, 4 * _MIB)
        per_row = (2 * D * x_itemsize       # x double buffer
                   + 2 * N_PAD * 4          # output double buffer (<= f32)
                   + 4 * Hp * 4)            # f32 LN/GELU temporaries
        block_b = min(max(avail // per_row, 8), 1024)
    if B <= 8:
        return B                            # full-batch block (block == array dim)
    tb = min(int(block_b), B)
    return max((tb // 8) * 8, 8)


def yesno_answer_head(x, w1, b1, gamma, beta, w2, b2,
                      *, block_b=None, weights_dtype=None,
                      approximate_gelu=False):
    """x: (B, D) -> logits (B, 2).

    weights_dtype: pass jnp.bfloat16 for the MXU-native bf16 path (recommended
    for production shapes on v5e/v6e/v7x: ~2-3x matmul throughput, half the
    x-stream DMA bytes and half the resident-weight VMEM).  Default None keeps
    the input dtype and matches the exact-erf PyTorch reference.
    """
    B, D = x.shape
    H = w1.shape[1]
    out_dtype = x.dtype

    if weights_dtype is not None:
        w1 = w1.astype(weights_dtype)
        w2 = w2.astype(weights_dtype)
        x = x.astype(weights_dtype)        # cast once in the wrapper, not per step

    # Lane-dense hidden width: zero-pad H to a multiple of 128.
    Hp = _round_up(H, 128)
    if Hp != H:
        w1 = jnp.pad(w1, ((0, 0), (0, Hp - H)))
        b1 = jnp.pad(b1, (0, Hp - H))
        gamma = jnp.pad(gamma, (0, Hp - H))
        beta = jnp.pad(beta, (0, Hp - H))
        w2 = jnp.pad(w2, ((0, Hp - H), (0, 0)))

    # Lane-dense second linear: (Hp, 2) -> (Hp, 128), (2,) -> (1, 128).
    w2p = jnp.pad(w2, ((0, 0), (0, N_PAD - w2.shape[1])))
    b2p = jnp.pad(b2, (0, N_PAD - b2.shape[0])).reshape(1, N_PAD)

    x_itemsize = jnp.dtype(x.dtype).itemsize
    w_itemsize = jnp.dtype(w1.dtype).itemsize
    out_itemsize = jnp.dtype(out_dtype).itemsize
    vmem_cap = _vmem_capacity_bytes()

    tb = _pick_row_tile(B, D, Hp, x_itemsize, w_itemsize, vmem_cap, block_b)
    grid = (pl.cdiv(B, tb),)               # partial last block handled by Pallas

    kernel = functools.partial(yesno_head_kernel, true_h=H,
                               approximate_gelu=approximate_gelu)

    def make_call(single_buffer_weights):
        def const_spec(shape):
            ndim = len(shape)
            if single_buffer_weights:
                return pl.BlockSpec(shape, lambda i: (0,) * ndim,
                                    pipeline_mode=pl.Buffered(1))
            return pl.BlockSpec(shape, lambda i: (0,) * ndim)

        weight_copies = 1 if single_buffer_weights else 2
        budget = (weight_copies * (D * Hp + Hp * N_PAD + 3 * Hp + N_PAD) * w_itemsize
                  + 2 * tb * D * x_itemsize          # x double buffer
                  + 2 * tb * N_PAD * out_itemsize    # output double buffer
                  + 4 * tb * Hp * 4                  # f32 temporaries
                  + 2 * _MIB)
        # Never lower the scoped limit below the platform default (16/32 MiB);
        # cap at physical VMEM minus headroom (v7x has only 64 MiB physical).
        vmem_limit = None
        if budget > 16 * _MIB:
            cap = max(vmem_cap - 16 * _MIB, 32 * _MIB)
            vmem_limit = int(min(max(budget, 32 * _MIB), cap))

        return pl.pallas_call(
            kernel,
            out_shape=jax.ShapeDtypeStruct((B, N_PAD), out_dtype),
            grid=grid,
            in_specs=[
                pl.BlockSpec((tb, D), lambda i: (i, 0)),   # x rows (pipelined)
                const_spec((D, Hp)),                       # W1 (VMEM-resident)
                const_spec((1, Hp)),                       # b1
                const_spec((1, Hp)),                       # gamma
                const_spec((1, Hp)),                       # beta
                const_spec((Hp, N_PAD)),                   # W2 padded (resident)
                const_spec((1, N_PAD)),                    # b2 padded
            ],
            out_specs=pl.BlockSpec((tb, N_PAD), lambda i: (i, 0)),
            compiler_params=pltpu.CompilerParams(
                dimension_semantics=("parallel",),
                vmem_limit_bytes=vmem_limit),
        )

    args = (x, w1, b1.reshape(1, Hp), gamma.reshape(1, Hp),
            beta.reshape(1, Hp), w2p, b2p)
    try:
        out_padded = jax.block_until_ready(make_call(True)(*args))
    except Exception:
        # Fallback if this jax build rejects pipeline_mode=pl.Buffered(1) on a
        # top-level pallas_call BlockSpec: default double-buffered weights.
        out_padded = make_call(False)(*args)

    # TODO(synk): for very large D on v7x (f32 W1 alone near 64 MiB) add a
    # K-tiled contraction grid axis with an f32 VMEM accumulator scratch.
    return out_padded[:B, :2]


def _reference(x, w1, b1, gamma, beta, w2, b2):
    h = x @ w1 + b1
    mean = h.mean(-1, keepdims=True)
    var = ((h - mean) ** 2).mean(-1, keepdims=True)
    h = (h - mean) / jnp.sqrt(var + LN_EPS)
    h = h * gamma + beta
    h = 0.5 * h * (1.0 + jax.lax.erf(h / math.sqrt(2.0)))
    return h @ w2 + b2


if __name__ == "__main__":
    B, D, H = 2, 32, 32   # input_dim=32, hidden_dim=32 (toy shapes)

    key = jax.random.PRNGKey(0)
    kx, kw1, kb1, kw2, kb2 = jax.random.split(key, 5)

    x = jax.random.normal(kx, (B, D), dtype=jnp.float32)

    # Deterministic synthetic parameter init (PyTorch-style uniform bounds).
    bound1 = 1.0 / math.sqrt(D)
    w1 = jax.random.uniform(kw1, (D, H), minval=-bound1, maxval=bound1,
                            dtype=jnp.float32)
    b1 = jax.random.uniform(kb1, (H,), minval=-bound1, maxval=bound1,
                            dtype=jnp.float32)
    gamma = jnp.ones((H,), dtype=jnp.float32)
    beta = jnp.zeros((H,), dtype=jnp.float32)
    bound2 = 1.0 / math.sqrt(H)
    w2 = jax.random.uniform(kw2, (H, 2), minval=-bound2, maxval=bound2,
                            dtype=jnp.float32)
    b2 = jax.random.uniform(kb2, (2,), minval=-bound2, maxval=bound2,
                            dtype=jnp.float32)

    ref = _reference(x, w1, b1, gamma, beta, w2, b2)

    # f32 path: matches the exact-erf PyTorch reference at tight tolerance.
    out = jax.block_until_ready(yesno_answer_head(x, w1, b1, gamma, beta, w2, b2))
    assert out.shape == (B, 2)
    assert jnp.allclose(out, ref, atol=1e-5, rtol=1e-5)

    # bf16 MXU path (production default on v5e/v6e/v7x): looser tolerance.
    out_bf16 = jax.block_until_ready(
        yesno_answer_head(x, w1, b1, gamma, beta, w2, b2,
                          weights_dtype=jnp.bfloat16))
    assert out_bf16.shape == (B, 2)
    assert bool(jnp.all(jnp.isfinite(out_bf16.astype(jnp.float32))))
    assert jnp.allclose(out_bf16.astype(jnp.float32), ref, atol=0.2, rtol=0.2)

    print("KERNEL_OK")
</pallas_src>

<mosaic_0001>
module attributes {stable_mosaic.version = 11 : i64} {
  func.func @yesno_head_kernel(%arg0: i32, %arg1: memref<2x32xf32, #tpu.memory_space<vmem>>, %arg2: memref<32x128xf32, #tpu.memory_space<vmem>>, %arg3: memref<1x128xf32, #tpu.memory_space<vmem>>, %arg4: memref<1x128xf32, #tpu.memory_space<vmem>>, %arg5: memref<1x128xf32, #tpu.memory_space<vmem>>, %arg6: memref<128x128xf32, #tpu.memory_space<vmem>>, %arg7: memref<1x128xf32, #tpu.memory_space<vmem>>, %arg8: memref<2x128xf32, #tpu.memory_space<vmem>>) attributes {dimension_semantics = [#tpu.dimension_semantics<parallel>], iteration_bounds = array<i64: 1>, scalar_prefetch = 0 : i64, scratch_operands = 0 : i64, tpu.core_type = #tpu.core_type<tc>, window_params = [{transform_indices = @transform_0, window_bounds = array<i64: 2, 32>}, {pipeline_mode = #tpu.pipeline_mode<synchronous>, transform_indices = @transform_1, window_bounds = array<i64: 32, 128>}, {pipeline_mode = #tpu.pipeline_mode<synchronous>, transform_indices = @transform_2, window_bounds = array<i64: 1, 128>}, {pipeline_mode = #tpu.pipeline_mode<synchronous>, transform_indices = @transform_3, window_bounds = array<i64: 1, 128>}, {pipeline_mode = #tpu.pipeline_mode<synchronous>, transform_indices = @transform_4, window_bounds = array<i64: 1, 128>}, {pipeline_mode = #tpu.pipeline_mode<synchronous>, transform_indices = @transform_5, window_bounds = array<i64: 128, 128>}, {pipeline_mode = #tpu.pipeline_mode<synchronous>, transform_indices = @transform_6, window_bounds = array<i64: 1, 128>}, {transform_indices = @transform_7, window_bounds = array<i64: 2, 128>}]} {
    %c0 = arith.constant 0 : index
    %c0_0 = arith.constant 0 : index
    %0 = vector.load %arg1[%c0, %c0_0] : memref<2x32xf32, #tpu.memory_space<vmem>>, vector<2x32xf32>
    %c0_1 = arith.constant 0 : index
    %c0_2 = arith.constant 0 : index
    %1 = vector.load %arg2[%c0_1, %c0_2] : memref<32x128xf32, #tpu.memory_space<vmem>>, vector<32x128xf32>
    %cst = arith.constant dense<0.000000e+00> : vector<2x128xf32>
    %2 = tpu.matmul %0, %1, %cst {dimension_numbers = #tpu.dot_dimension_numbers<[1], [0], [0], [1], [0, 0, 1, 1], [], []>} : vector<2x32xf32>, vector<32x128xf32>, vector<2x128xf32> -> vector<2x128xf32>
    %c0_3 = arith.constant 0 : index
    %c0_4 = arith.constant 0 : index
    %3 = vector.load %arg3[%c0_3, %c0_4] : memref<1x128xf32, #tpu.memory_space<vmem>>, vector<1x128xf32>
    %4 = vector.broadcast %3 : vector<1x128xf32> to vector<2x128xf32>
    %5 = arith.addf %2, %4 : vector<2x128xf32>
    %cst_5 = arith.constant dense<0.000000e+00> : vector<2xf32>
    %6 = vector.multi_reduction <add>, %5, %cst_5 [1] : vector<2x128xf32> to vector<2xf32>
    %7 = vector.shape_cast %6 : vector<2xf32> to vector<2x1xf32>
    %cst_6 = arith.constant 3.125000e-02 : f32
    %8 = vector.broadcast %cst_6 : f32 to vector<2x1xf32>
    %9 = arith.mulf %7, %8 : vector<2x1xf32>
    %10 = arith.mulf %5, %5 : vector<2x128xf32>
    %cst_7 = arith.constant dense<0.000000e+00> : vector<2xf32>
    %11 = vector.multi_reduction <add>, %10, %cst_7 [1] : vector<2x128xf32> to vector<2xf32>
    %12 = vector.shape_cast %11 : vector<2xf32> to vector<2x1xf32>
    %cst_8 = arith.constant 3.125000e-02 : f32
    %13 = vector.broadcast %cst_8 : f32 to vector<2x1xf32>
    %14 = arith.mulf %12, %13 : vector<2x1xf32>
    %15 = arith.mulf %9, %9 : vector<2x1xf32>
    %16 = arith.subf %14, %15 : vector<2x1xf32>
    %cst_9 = arith.constant 0.000000e+00 : f32
    %17 = vector.broadcast %cst_9 : f32 to vector<2x1xf32>
    %18 = arith.maximumf %16, %17 : vector<2x1xf32>
    %19 = vector.broadcast %9 : vector<2x1xf32> to vector<2x128xf32>
    %20 = arith.subf %5, %19 : vector<2x128xf32>
    %cst_10 = arith.constant 9.99999974E-6 : f32
    %21 = vector.broadcast %cst_10 : f32 to vector<2x1xf32>
    %22 = arith.addf %18, %21 : vector<2x1xf32>
    %23 = math.rsqrt %22 : vector<2x1xf32>
    %24 = vector.broadcast %23 : vector<2x1xf32> to vector<2x128xf32>
    %25 = arith.mulf %20, %24 : vector<2x128xf32>
    %c0_11 = arith.constant 0 : index
    %c0_12 = arith.constant 0 : index
    %26 = vector.load %arg4[%c0_11, %c0_12] : memref<1x128xf32, #tpu.memory_space<vmem>>, vector<1x128xf32>
    %27 = vector.broadcast %26 : vector<1x128xf32> to vector<2x128xf32>
    %28 = arith.mulf %25, %27 : vector<2x128xf32>
    %c0_13 = arith.constant 0 : index
    %c0_14 = arith.constant 0 : index
    %29 = vector.load %arg5[%c0_13, %c0_14] : memref<1x128xf32, #tpu.memory_space<vmem>>, vector<1x128xf32>
    %30 = vector.broadcast %29 : vector<1x128xf32> to vector<2x128xf32>
    %31 = arith.addf %28, %30 : vector<2x128xf32>
    %cst_15 = arith.constant 5.000000e-01 : f32
    %32 = vector.broadcast %cst_15 : f32 to vector<2x128xf32>
    %33 = arith.mulf %32, %31 : vector<2x128xf32>
    %cst_16 = arith.constant 0.707106769 : f32
    %34 = vector.broadcast %cst_16 : f32 to vector<2x128xf32>
    %35 = arith.mulf %31, %34 : vector<2x128xf32>
    %36 = math.erf %35 : vector<2x128xf32>
    %cst_17 = arith.constant 1.000000e+00 : f32
    %37 = vector.broadcast %cst_17 : f32 to vector<2x128xf32>
    %38 = arith.addf %37, %36 : vector<2x128xf32>
    %39 = arith.mulf %33, %38 : vector<2x128xf32>
    %c0_18 = arith.constant 0 : index
    %c0_19 = arith.constant 0 : index
    %40 = vector.load %arg6[%c0_18, %c0_19] : memref<128x128xf32, #tpu.memory_space<vmem>>, vector<128x128xf32>
    %cst_20 = arith.constant dense<0.000000e+00> : vector<2x128xf32>
    %41 = tpu.matmul %39, %40, %cst_20 {dimension_numbers = #tpu.dot_dimension_numbers<[1], [0], [0], [1], [0, 0, 1, 1], [], []>} : vector<2x128xf32>, vector<128x128xf32>, vector<2x128xf32> -> vector<2x128xf32>
    %c0_21 = arith.constant 0 : index
    %c0_22 = arith.constant 0 : index
    %42 = vector.load %arg7[%c0_21, %c0_22] : memref<1x128xf32, #tpu.memory_space<vmem>>, vector<1x128xf32>
    %43 = vector.broadcast %42 : vector<1x128xf32> to vector<2x128xf32>
    %44 = arith.addf %41, %43 : vector<2x128xf32>
    %c0_23 = arith.constant 0 : index
    %c0_24 = arith.constant 0 : index
    %45 = vector.load %arg8[%c0_23, %c0_24] : memref<2x128xf32, #tpu.memory_space<vmem>>, vector<2x128xf32>
    tpu.vector_store %arg8[%c0_23, %c0_24], %44 {strides = array<i32>} : memref<2x128xf32, #tpu.memory_space<vmem>>, vector<2x128xf32>,
    return
  }
  func.func @transform_0(%arg0: i32) -> (i32, i32) {
    %c0_i32 = arith.constant 0 : i32
    %c0_i32_0 = arith.constant 0 : i32
    return %arg0, %c0_i32 : i32, i32
  }
  func.func @transform_1(%arg0: i32) -> (i32, i32) {
    %c0_i32 = arith.constant 0 : i32
    %c0_i32_0 = arith.constant 0 : i32
    %c0_i32_1 = arith.constant 0 : i32
    return %c0_i32, %c0_i32_0 : i32, i32
  }
  func.func @transform_2(%arg0: i32) -> (i32, i32) {
    %c0_i32 = arith.constant 0 : i32
    %c0_i32_0 = arith.constant 0 : i32
    %c0_i32_1 = arith.constant 0 : i32
    return %c0_i32, %c0_i32_0 : i32, i32
  }
  func.func @transform_3(%arg0: i32) -> (i32, i32) {
    %c0_i32 = arith.constant 0 : i32
    %c0_i32_0 = arith.constant 0 : i32
    %c0_i32_1 = arith.constant 0 : i32
    return %c0_i32, %c0_i32_0 : i32, i32
  }
  func.func @transform_4(%arg0: i32) -> (i32, i32) {
    %c0_i32 = arith.constant 0 : i32
    %c0_i32_0 = arith.constant 0 : i32
    %c0_i32_1 = arith.constant 0 : i32
    return %c0_i32, %c0_i32_0 : i32, i32
  }
  func.func @transform_5(%arg0: i32) -> (i32, i32) {
    %c0_i32 = arith.constant 0 : i32
    %c0_i32_0 = arith.constant 0 : i32
    %c0_i32_1 = arith.constant 0 : i32
    return %c0_i32, %c0_i32_0 : i32, i32
  }
  func.func @transform_6(%arg0: i32) -> (i32, i32) {
    %c0_i32 = arith.constant 0 : i32
    %c0_i32_0 = arith.constant 0 : i32
    %c0_i32_1 = arith.constant 0 : i32
    return %c0_i32, %c0_i32_0 : i32, i32
  }
  func.func @transform_7(%arg0: i32) -> (i32, i32) {
    %c0_i32 = arith.constant 0 : i32
    %c0_i32_0 = arith.constant 0 : i32
    return %arg0, %c0_i32 : i32, i32
  }
}

module attributes {stable_mosaic.version = 11 : i64} {
  func.func @yesno_head_kernel(%arg0: i32, %arg1: memref<2x32xf32, #tpu.memory_space<vmem>>, %arg2: memref<32x128xf32, #tpu.memory_space<vmem>>, %arg3: memref<1x128xf32, #tpu.memory_space<vmem>>, %arg4: memref<1x128xf32, #tpu.memory_space<vmem>>, %arg5: memref<1x128xf32, #tpu.memory_space<vmem>>, %arg6: memref<128x128xf32, #tpu.memory_space<vmem>>, %arg7: memref<1x128xf32, #tpu.memory_space<vmem>>, %arg8: memref<2x128xf32, #tpu.memory_space<vmem>>) attributes {dimension_semantics = [#tpu.dimension_semantics<parallel>], iteration_bounds = array<i64: 1>, scalar_prefetch = 0 : i64, scratch_operands = 0 : i64, tpu.core_type = #tpu.core_type<tc>, window_params = [{transform_indices = @transform_0, window_bounds = array<i64: 2, 32>}, {pipeline_mode = #tpu.pipeline_mode<synchronous>, transform_indices = @transform_1, window_bounds = array<i64: 32, 128>}, {pipeline_mode = #tpu.pipeline_mode<synchronous>, transform_indices = @transform_2, window_bounds = array<i64: 1, 128>}, {pipeline_mode = #tpu.pipeline_mode<synchronous>, transform_indices = @transform_3, window_bounds = array<i64: 1, 128>}, {pipeline_mode = #tpu.pipeline_mode<synchronous>, transform_indices = @transform_4, window_bounds = array<i64: 1, 128>}, {pipeline_mode = #tpu.pipeline_mode<synchronous>, transform_indices = @transform_5, window_bounds = array<i64: 128, 128>}, {pipeline_mode = #tpu.pipeline_mode<synchronous>, transform_indices = @transform_6, window_bounds = array<i64: 1, 128>}, {transform_indices = @transform_7, window_bounds = array<i64: 2, 128>}]} {
    %c0 = arith.constant 0 : index
    %c0_0 = arith.constant 0 : index
    %0 = vector.load %arg1[%c0, %c0_0] : memref<2x32xf32, #tpu.memory_space<vmem>>, vector<2x32xf32>
    %c0_1 = arith.constant 0 : index
    %c0_2 = arith.constant 0 : index
    %1 = vector.load %arg2[%c0_1, %c0_2] : memref<32x128xf32, #tpu.memory_space<vmem>>, vector<32x128xf32>
    %cst = arith.constant dense<0.000000e+00> : vector<2x128xf32>
    %2 = tpu.matmul %0, %1, %cst {dimension_numbers = #tpu.dot_dimension_numbers<[1], [0], [0], [1], [0, 0, 1, 1], [], []>} : vector<2x32xf32>, vector<32x128xf32>, vector<2x128xf32> -> vector<2x128xf32>
    %c0_3 = arith.constant 0 : index
    %c0_4 = arith.constant 0 : index
    %3 = vector.load %arg3[%c0_3, %c0_4] : memref<1x128xf32, #tpu.memory_space<vmem>>, vector<1x128xf32>
    %4 = vector.broadcast %3 : vector<1x128xf32> to vector<2x128xf32>
    %5 = arith.addf %2, %4 : vector<2x128xf32>
    %cst_5 = arith.constant dense<0.000000e+00> : vector<2xf32>
    %6 = vector.multi_reduction <add>, %5, %cst_5 [1] : vector<2x128xf32> to vector<2xf32>
    %7 = vector.shape_cast %6 : vector<2xf32> to vector<2x1xf32>
    %cst_6 = arith.constant 3.125000e-02 : f32
    %8 = vector.broadcast %cst_6 : f32 to vector<2x1xf32>
    %9 = arith.mulf %7, %8 : vector<2x1xf32>
    %10 = arith.mulf %5, %5 : vector<2x128xf32>
    %cst_7 = arith.constant dense<0.000000e+00> : vector<2xf32>
    %11 = vector.multi_reduction <add>, %10, %cst_7 [1] : vector<2x128xf32> to vector<2xf32>
    %12 = vector.shape_cast %11 : vector<2xf32> to vector<2x1xf32>
    %cst_8 = arith.constant 3.125000e-02 : f32
    %13 = vector.broadcast %cst_8 : f32 to vector<2x1xf32>
    %14 = arith.mulf %12, %13 : vector<2x1xf32>
    %15 = arith.mulf %9, %9 : vector<2x1xf32>
    %16 = arith.subf %14, %15 : vector<2x1xf32>
    %cst_9 = arith.constant 0.000000e+00 : f32
    %17 = vector.broadcast %cst_9 : f32 to vector<2x1xf32>
    %18 = arith.maximumf %16, %17 : vector<2x1xf32>
    %19 = vector.broadcast %9 : vector<2x1xf32> to vector<2x128xf32>
    %20 = arith.subf %5, %19 : vector<2x128xf32>
    %cst_10 = arith.constant 9.99999974E-6 : f32
    %21 = vector.broadcast %cst_10 : f32 to vector<2x1xf32>
    %22 = arith.addf %18, %21 : vector<2x1xf32>
    %23 = math.rsqrt %22 : vector<2x1xf32>
    %24 = vector.broadcast %23 : vector<2x1xf32> to vector<2x128xf32>
    %25 = arith.mulf %20, %24 : vector<2x128xf32>
    %c0_11 = arith.constant 0 : index
    %c0_12 = arith.constant 0 : index
    %26 = vector.load %arg4[%c0_11, %c0_12] : memref<1x128xf32, #tpu.memory_space<vmem>>, vector<1x128xf32>
    %27 = vector.broadcast %26 : vector<1x128xf32> to vector<2x128xf32>
    %28 = arith.mulf %25, %27 : vector<2x128xf32>
    %c0_13 = arith.constant 0 : index
    %c0_14 = arith.constant 0 : index
    %29 = vector.load %arg5[%c0_13, %c0_14] : memref<1x128xf32, #tpu.memory_space<vmem>>, vector<1x128xf32>
    %30 = vector.broadcast %29 : vector<1x128xf32> to vector<2x128xf32>
    %31 = arith.addf %28, %30 : vector<2x128xf32>
    %cst_15 = arith.constant 5.000000e-01 : f32
    %32 = vector.broadcast %cst_15 : f32 to vector<2x128xf32>
    %33 = arith.mulf %32, %31 : vector<2x128xf32>
    %cst_16 = arith.constant 0.707106769 : f32
    %34 = vector.broadcast %cst_16 : f32 to vector<2x128xf32>
    %35 = arith.mulf %31, %34 : vector<2x128xf32>
    %36 = math.erf %35 : vector<2x128xf32>
    %cst_17 = arith.constant 1.000000e+00 : f32
    %37 = vector.broadcast %cst_17 : f32 to vector<2x128xf32>
    %38 = arith.addf %37, %36 : vector<2x128xf32>
    %39 = arith.mulf %33, %38 : vector<2x128xf32>
    %c0_18 = arith.constant 0 : index
    %c0_19 = arith.constant 0 : index
    %40 = vector.load %arg6[%c0_18, %c0_19] : memref<128x128xf32, #tpu.memory_space<vmem>>, vector<128x128xf32>
    %cst_20 = arith.constant dense<0.000000e+00> : vector<2x128xf32>
    %41 = tpu.matmul %39, %40, %cst_20 {dimension_numbers = #tpu.dot_dimension_numbers<[1], [0], [0], [1], [0, 0, 1, 1], [], []>} : vector<2x128xf32>, vector<128x128xf32>, vector<2x128xf32> -> vector<2x128xf32>
    %c0_21 = arith.constant 0 : index
    %c0_22 = arith.constant 0 : index
    %42 = vector.load %arg7[%c0_21, %c0_22] : memref<1x128xf32, #tpu.memory_space<vmem>>, vector<1x128xf32>
    %43 = vector.broadcast %42 : vector<1x128xf32> to vector<2x128xf32>
    %44 = arith.addf %41, %43 : vector<2x128xf32>
    %c0_23 = arith.constant 0 : index
    %c0_24 = arith.constant 0 : index
    %45 = vector.load %arg8[%c0_23, %c0_24] : memref<2x128xf32, #tpu.memory_space<vmem>>, vector<2x128xf32>
    tpu.vector_store %arg8[%c0_23, %c0_24], %44 {strides = array<i32>} : memref<2x128xf32, #tpu.memory_space<vmem>>, vector<2x128xf32>,
    return
  }
  func.func @transform_0(%arg0: i32) -> (i32, i32) {
    %c0_i32 = arith.constant 0 : i32
    %c0_i32_0 = arith.constant 0 : i32
    return %arg0, %c0_i32 : i32, i32
  }
  func.func @transform_1(%arg0: i32) -> (i32, i32) {
    %c0_i32 = arith.constant 0 : i32
    %c0_i32_0 = arith.constant 0 : i32
    %c0_i32_1 = arith.constant 0 : i32
    return %c0_i32, %c0_i32_0 : i32, i32
  }
  func.func @transform_2(%arg0: i32) -> (i32, i32) {
    %c0_i32 = arith.constant 0 : i32
    %c0_i32_0 = arith.constant 0 : i32
    %c0_i32_1 = arith.constant 0 : i32
    return %c0_i32, %c0_i32_0 : i32, i32
  }
  func.func @transform_3(%arg0: i32) -> (i32, i32) {
    %c0_i32 = arith.constant 0 : i32
    %c0_i32_0 = arith.constant 0 : i32
    %c0_i32_1 = arith.constant 0 : i32
    return %c0_i32, %c0_i32_0 : i32, i32
  }
  func.func @transform_4(%arg0: i32) -> (i32, i32) {
    %c0_i32 = arith.constant 0 : i32
    %c0_i32_0 = arith.constant 0 : i32
    %c0_i32_1 = arith.constant 0 : i32
    return %c0_i32, %c0_i32_0 : i32, i32
  }
  func.func @transform_5(%arg0: i32) -> (i32, i32) {
    %c0_i32 = arith.constant 0 : i32
    %c0_i32_0 = arith.constant 0 : i32
    %c0_i32_1 = arith.constant 0 : i32
    return %c0_i32, %c0_i32_0 : i32, i32
  }
  func.func @transform_6(%arg0: i32) -> (i32, i32) {
    %c0_i32 = arith.constant 0 : i32
    %c0_i32_0 = arith.constant 0 : i32
    %c0_i32_1 = arith.constant 0 : i32
    return %c0_i32, %c0_i32_0 : i32, i32
  }
  func.func @transform_7(%arg0: i32) -> (i32, i32) {
    %c0_i32 = arith.constant 0 : i32
    %c0_i32_0 = arith.constant 0 : i32
    return %arg0, %c0_i32 : i32, i32
  }
}

</mosaic_0001>

<llo_original>
// kernel: tpu_custom_call.1
$region0: #{tpu_custom_call.1}
  #allocation0 [shape = 'u32[]', space=smem, size = 0x4, offset = 0x4, fixed_abs, tag = 'smem constant byte address 0x4 - core index']
  #allocation1 [shape = 'u32[144,128]{1,0:T(1,128)}', space=vmem, size = 0x12000, scoped, tag = 'internal scratch']
  %s0 = inlined_call_operand.hbm [shape: f32[2,32], index: 0, kind: input, shape index: {}]
  %s1 = inlined_call_operand.hbm [shape: f32[32,128], index: 1, kind: input, shape index: {}]
  %s2 = inlined_call_operand.vmem [shape: f32[1,128], index: 2, kind: input, shape index: {}]
  %s3 = inlined_call_operand.vmem [shape: f32[1,128], index: 3, kind: input, shape index: {}]
  %s4 = inlined_call_operand.vmem [shape: f32[1,128], index: 4, kind: input, shape index: {}]
  %s5 = inlined_call_operand.hbm [shape: f32[128,128], index: 5, kind: input, shape index: {}]
  %s6 = inlined_call_operand.vmem [shape: f32[1,128], index: 6, kind: input, shape index: {}]
  %s7 = inlined_call_operand.hbm [shape: f32[2,128], index: 7, kind: output, shape index: {}]
  %s8 = sld [smem:[#allocation0]]
  $region50: #{tpu_custom_call.1} parent=0
    _
  %s10 = ssub.s32 1, %s8
  %s11 = scalar_select 0, %s10, %s8
  $region1: #{tpu_custom_call.1} parent=0
    #allocation2 [shape = 'u8[1024]{0}', space=vmem, size = 0x400, scoped, tag = 'input window, operand 0, single buffered']
    #allocation3 [shape = 's32[1]{0}', space=sflag, size = 0x4, scoped, tag = 'scoped memory for tpu_custom_call.1']
    #allocation4 [shape = 's32[1]{0}', space=sflag, size = 0x4, scoped, tag = 'scoped memory for tpu_custom_call.1']
    #allocation5 [shape = 'u8[16384]{0}', space=vmem, size = 0x4000, scoped, tag = 'input window, operand 1, single buffered']
    #allocation6 [shape = 's32[1]{0}', space=sflag, size = 0x4, scoped, tag = 'scoped memory for tpu_custom_call.1']
    #allocation7 [shape = 'u8[65536]{0}', space=vmem, size = 0x10000, scoped, tag = 'input window, operand 5, single buffered']
    #allocation8 [shape = 'u8[1024]{0}', space=vmem, size = 0x400, scoped, tag = 'output window, operand 0, single buffered']
    %12 = vsyncpa [#allocation3], 0
    %13 = vsyncpa [#allocation6], 0
    %14 = vsyncpa [#allocation4], 0
    // Predicated region
    $region2: #{tpu_custom_call.1} parent=1 // pred_check
      _
    $region3: #{tpu_custom_call.1} parent=1 // pred_check_branch
      %16 = sbr.rel (0) target = $region5
    $region4: #{tpu_custom_call.1} parent=1 // pred_region
      %s18 = ssub.s32 32, 32
      %19 = vsyncadd [#allocation3], %s18
      %s21 = sshll.u32 [#allocation2], 4
      %s22 = int_to_ptr.vmem [resolvable:$true] %s21
      %24 = dma.hbm_to_vmem [thread:$0]  %s0, 32, %s22, [#allocation3]
    $region5: #{tpu_custom_call.1} parent=1 // pred_fallthru
      _
    // Predicated region
    $region6: #{tpu_custom_call.1} parent=1 // pred_check
      _
    $region7: #{tpu_custom_call.1} parent=1 // pred_check_branch
      %26 = sbr.rel (0) target = $region9
    $region8: #{tpu_custom_call.1} parent=1 // pred_region
      %s28 = ssub.s32 512, 512
      %29 = vsyncadd [#allocation6], %s28
      %s30 = sshll.u32 [#allocation5], 4
      %s31 = int_to_ptr.vmem [resolvable:$true] %s30
      %36 = dma.hbm_to_vmem [thread:$0]  %s1, 512, %s31, [#allocation6], 128, 128, 8
    $region9: #{tpu_custom_call.1} parent=1 // pred_fallthru
      _
    // Predicated region
    $region10: #{tpu_custom_call.1} parent=1 // pred_check
      _
    $region11: #{tpu_custom_call.1} parent=1 // pred_check_branch
      %38 = sbr.rel (0) target = $region13
    $region12: #{tpu_custom_call.1} parent=1 // pred_region
      _
    $region13: #{tpu_custom_call.1} parent=1 // pred_fallthru
      _
    // Predicated region
    $region14: #{tpu_custom_call.1} parent=1 // pred_check
      _
    $region15: #{tpu_custom_call.1} parent=1 // pred_check_branch
      %40 = sbr.rel (0) target = $region17
    $region16: #{tpu_custom_call.1} parent=1 // pred_region
      _
    $region17: #{tpu_custom_call.1} parent=1 // pred_fallthru
      _
    // Predicated region
    $region18: #{tpu_custom_call.1} parent=1 // pred_check
      _
    $region19: #{tpu_custom_call.1} parent=1 // pred_check_branch
      %42 = sbr.rel (0) target = $region21
    $region20: #{tpu_custom_call.1} parent=1 // pred_region
      _
    $region21: #{tpu_custom_call.1} parent=1 // pred_fallthru
      _
    // Predicated region
    $region22: #{tpu_custom_call.1} parent=1 // pred_check
      _
    $region23: #{tpu_custom_call.1} parent=1 // pred_check_branch
      %44 = sbr.rel (0) target = $region25
    $region24: #{tpu_custom_call.1} parent=1 // pred_region
      %s46 = ssub.s32 2048, 2048
      %47 = vsyncadd [#allocation6], %s46
      %s48 = sshll.u32 [#allocation7], 4
      %s49 = int_to_ptr.vmem [resolvable:$true] %s48
      %54 = dma.hbm_to_vmem [thread:$0]  %s5, 2048, %s49, [#allocation6], 128, 128, 8
    $region25: #{tpu_custom_call.1} parent=1 // pred_fallthru
      _
    // Predicated region
    $region26: #{tpu_custom_call.1} parent=1 // pred_check
      _
    $region27: #{tpu_custom_call.1} parent=1 // pred_check_branch
      %56 = sbr.rel (0) target = $region29
    $region28: #{tpu_custom_call.1} parent=1 // pred_region
      _
    $region29: #{tpu_custom_call.1} parent=1 // pred_fallthru
      _
    // Predicated region
    $region30: #{tpu_custom_call.1} parent=1 // pred_check
      _
    $region31: #{tpu_custom_call.1} parent=1 // pred_check_branch
      %58 = sbr.rel (0) target = $region33
    $region32: #{tpu_custom_call.1} parent=1 // pred_region
      %59 = dma.done [#allocation3], 32
    $region33: #{tpu_custom_call.1} parent=1 // pred_fallthru
      _
    // Predicated region
    $region34: #{tpu_custom_call.1} parent=1 // pred_check
      _
    $region35: #{tpu_custom_call.1} parent=1 // pred_check_branch
      %61 = sbr.rel (0) target = $region37
    $region36: #{tpu_custom_call.1} parent=1 // pred_region
      %62 = dma.done [#allocation6], 512
    $region37: #{tpu_custom_call.1} parent=1 // pred_fallthru
      _
    // Predicated region
    $region38: #{tpu_custom_call.1} parent=1 // pred_check
      _
    $region39: #{tpu_custom_call.1} parent=1 // pred_check_branch
      %64 = sbr.rel (0) target = $region41
    $region40: #{tpu_custom_call.1} parent=1 // pred_region
      %65 = dma.done [#allocation6], 2048
    $region41: #{tpu_custom_call.1} parent=1 // pred_fallthru
      _
    %v66 = vld [vmem:[#allocation2] sm:$0x3]
    %v67 = vld [vmem:[#allocation5] sm:$0xff]
    %v68 = vld [vmem:[#allocation5 + $0x8] sm:$0xff]
    %v69 = vld [vmem:[#allocation5 + $0x10] sm:$0xff]
    %v70 = vld [vmem:[#allocation5 + $0x18] sm:$0xff]
    %v71 = vld [vmem:[%s2] sm:$0x1]
    %v73 = vlaneseq
    %v74 = vshrl.u32 %v73, 7
    %v75 = vsub.s32 0, %v74
    %v76 = vrot.slane %v71, %v75
    %vm78 = vcmask 261120
    %v80 = vsel %vm78, %v66, 0
    %82 = vmatprep.subr.mxu0 0.0
    %83 = vmatpush1.msra.mxu0 %v67
    %84 = vmatprep.subr.mxu0 0.0
    %85 = vmatpush1.msra.mxu0 %v68
    %86 = vmatprep.subr.mxu0 0.0
    %87 = vmatpush1.msra.mxu0 %v69
    %88 = vmatprep.subr.mxu0 0.0
    %89 = vmatpush1.msra.mxu0 %v70
    %90 = vmatprep.subr.mxu0 0.0
    %91 = vmatpush1.msra.mxu0 0.0
    %92 = vmatprep.subr.mxu0 0.0
    %93 = vmatpush1.msra.mxu0 0.0
    %94 = vmatprep.subr.mxu0 0.0
    %95 = vmatpush1.msra.mxu0 0.0
    %96 = vmatprep.subr.mxu0 0.0
    %97 = vmatpush1.msra.mxu0 0.0
    %98 = vmatprep.subr.mxu0 0.0
    %99 = vmatpush1.msra.mxu0 0.0
    %100 = vmatprep.subr.mxu0 0.0
    %101 = vmatpush1.msra.mxu0 0.0
    %102 = vmatprep.subr.mxu0 0.0
    %103 = vmatpush1.msra.mxu0 0.0
    %104 = vmatprep.subr.mxu0 0.0
    %105 = vmatpush1.msra.mxu0 0.0
    %106 = vmatprep.subr.mxu0 0.0
    %107 = vmatpush1.msra.mxu0 0.0
    %108 = vmatprep.subr.mxu0 0.0
    %109 = vmatpush1.msra.mxu0 0.0
    %110 = vmatprep.subr.mxu0 0.0
    %111 = vmatpush1.msra.mxu0 0.0
    %112 = vmatprep.subr.mxu0 0.0
    %113 = vmatpush1.msra.mxu0 0.0
    %114 = vmatprep.subr.mxu0 0.0
    %115 = vmatpush1.msra.mxu0 0.0
    %116 = vmatprep.subr.mxu0 0.0
    %117 = vmatpush1.msra.mxu0 0.0
    %118 = vmatprep.subr.mxu0 0.0
    %119 = vmatpush1.msra.mxu0 0.0
    %120 = vmatprep.subr.mxu0 0.0
    %121 = vmatpush1.msra.mxu0 0.0
    %122 = vmatprep.subr.mxu0 0.0
    %123 = vmatpush1.msra.mxu0 0.0
    %124 = vmatprep.subr.mxu0 0.0
    %125 = vmatpush1.msra.mxu0 0.0
    %126 = vmatprep.subr.mxu0 0.0
    %127 = vmatpush1.msra.mxu0 0.0
    %128 = vmatprep.subr.mxu0 0.0
    %129 = vmatpush1.msra.mxu0 0.0
    %130 = vmatprep.subr.mxu0 0.0
    %131 = vmatpush1.msra.mxu0 0.0
    %132 = vmatprep.subr.mxu0 0.0
    %133 = vmatpush1.msra.mxu0 0.0
    %134 = vmatprep.subr.mxu0 0.0
    %135 = vmatpush1.msra.mxu0 0.0
    %136 = vmatprep.subr.mxu0 0.0
    %137 = vmatpush1.msra.mxu0 0.0
    %138 = vmatprep.subr.mxu0 0.0
    %139 = vmatpush1.msra.mxu0 0.0
    %140 = vmatprep.subr.mxu0 0.0
    %141 = vmatpush1.msra.mxu0 0.0
    %142 = vmatprep.subr.mxu0 0.0
    %143 = vmatpush1.msra.mxu0 0.0
    %144 = vmatprep.subr.mxu0 0.0
    %145 = vmatpush1.msra.mxu0 0.0
    %146 = vmatprep.mubr.f32.mxu0 0.0
    %147 = vmatmul.mubr.f32.gmra.mrb[0].mxu0 %v80
    %v148 = vpop.f32.mrb[0].mxu0
    %v149 = vadd.f32 %v76, %v148
    %v150 = vpop.f32.mrb[0].mxu0
    %151 = vdwg.mxu0
    %vm152 = vcmask 1041408
    %v153 = vsel %vm152, %v149, 0.0
    %154 = vadd.xlane.f32.xlu0 %v153
    %v155 = vpop.xlane.xlu0 %154
    %v156 = vmul.f32 %v155, 0.03125
    %v157 = vmul.f32 %v149, %v149
    %v158 = vsel %vm152, %v157, 0.0
    %159 = vadd.xlane.f32.xlu0 %v158
    %v160 = vpop.xlane.xlu0 %159
    %v161 = vmul.f32 %v160, 0.03125
    %v162 = vmul.f32 %v156, %v156
    %v163 = vsub.f32 %v161, %v162
    %v164 = vmax.f32 %v163, 0.0
    %v165 = vsub.f32 %v149, %v156
    %v166 = vadd.f32 %v164, 1e-05
    %v167 = vrsqrt.pop %v166
    %v168 = vmul.f32 %v165, %v167
    %v169 = vld [vmem:[%s3] sm:$0x1]
    %v171 = vlaneseq
    %v172 = vshrl.u32 %v171, 7
    %v173 = vsub.s32 0, %v172
    %v174 = vrot.slane %v169, %v173
    %v176 = vmul.f32 %v168, %v174
    %v177 = vld [vmem:[%s4] sm:$0x1]
    %v179 = vlaneseq
    %v180 = vshrl.u32 %v179, 7
    %v181 = vsub.s32 0, %v180
    %v182 = vrot.slane %v177, %v181
    %v184 = vadd.f32 %v176, %v182
    %v185 = vmul.f32 %v184, 0.5
    %v186 = vmul.f32 %v184, 0.70710677
    %v187 = verf.f32.pop %v186
    %v188 = vadd.f32 %v187, 1.0
    %v189 = vmul.f32 %v185, %v188
    %v190 = vld [vmem:[#allocation7] sm:$0xff]
    %v191 = vld [vmem:[#allocation7 + $0x8] sm:$0xff]
    %v192 = vld [vmem:[#allocation7 + $0x10] sm:$0xff]
    %v193 = vld [vmem:[#allocation7 + $0x18] sm:$0xff]
    %v194 = vld [vmem:[#allocation7 + $0x20] sm:$0xff]
    %v195 = vld [vmem:[#allocation7 + $0x28] sm:$0xff]
    %v196 = vld [vmem:[#allocation7 + $0x30] sm:$0xff]
    %v197 = vld [vmem:[#allocation7 + $0x38] sm:$0xff]
    %v198 = vld [vmem:[#allocation7 + $0x40] sm:$0xff]
    %v199 = vld [vmem:[#allocation7 + $0x48] sm:$0xff]
    %v200 = vld [vmem:[#allocation7 + $0x50] sm:$0xff]
    %v201 = vld [vmem:[#allocation7 + $0x58] sm:$0xff]
    %v202 = vld [vmem:[#allocation7 + $0x60] sm:$0xff]
    %v203 = vld [vmem:[#allocation7 + $0x68] sm:$0xff]
    %v204 = vld [vmem:[#allocation7 + $0x70] sm:$0xff]
    %v205 = vld [vmem:[#allocation7 + $0x78] sm:$0xff]
    %v206 = vld [vmem:[%s6] sm:$0x1]
    %v208 = vlaneseq
    %v209 = vshrl.u32 %v208, 7
    %v210 = vsub.s32 0, %v209
    %v211 = vrot.slane %v206, %v210
    %213 = vmatprep.subr.mxu0 0.0
    %214 = vmatpush1.msra.mxu0 %v190
    %215 = vmatprep.subr.mxu0 0.0
    %216 = vmatpush1.msra.mxu0 %v191
    %217 = vmatprep.subr.mxu0 0.0
    %218 = vmatpush1.msra.mxu0 %v192
    %219 = vmatprep.subr.mxu0 0.0
    %220 = vmatpush1.msra.mxu0 %v193
    %221 = vmatprep.subr.mxu0 0.0
    %222 = vmatpush1.msra.mxu0 %v194
    %223 = vmatprep.subr.mxu0 0.0
    %224 = vmatpush1.msra.mxu0 %v195
    %225 = vmatprep.subr.mxu0 0.0
    %226 = vmatpush1.msra.mxu0 %v196
    %227 = vmatprep.subr.mxu0 0.0
    %228 = vmatpush1.msra.mxu0 %v197
    %229 = vmatprep.subr.mxu0 0.0
    %230 = vmatpush1.msra.mxu0 %v198
    %231 = vmatprep.subr.mxu0 0.0
    %232 = vmatpush1.msra.mxu0 %v199
    %233 = vmatprep.subr.mxu0 0.0
    %234 = vmatpush1.msra.mxu0 %v200
    %235 = vmatprep.subr.mxu0 0.0
    %236 = vmatpush1.msra.mxu0 %v201
    %237 = vmatprep.subr.mxu0 0.0
    %238 = vmatpush1.msra.mxu0 %v202
    %239 = vmatprep.subr.mxu0 0.0
    %240 = vmatpush1.msra.mxu0 %v203
    %241 = vmatprep.subr.mxu0 0.0
    %242 = vmatpush1.msra.mxu0 %v204
    %243 = vmatprep.subr.mxu0 0.0
    %244 = vmatpush1.msra.mxu0 %v205
    %245 = vmatprep.subr.mxu0 0.0
    %246 = vmatpush1.msra.mxu0 0.0
    %247 = vmatprep.subr.mxu0 0.0
    %248 = vmatpush1.msra.mxu0 0.0
    %249 = vmatprep.subr.mxu0 0.0
    %250 = vmatpush1.msra.mxu0 0.0
    %251 = vmatprep.subr.mxu0 0.0
    %252 = vmatpush1.msra.mxu0 0.0
    %253 = vmatprep.subr.mxu0 0.0
    %254 = vmatpush1.msra.mxu0 0.0
    %255 = vmatprep.subr.mxu0 0.0
    %256 = vmatpush1.msra.mxu0 0.0
    %257 = vmatprep.subr.mxu0 0.0
    %258 = vmatpush1.msra.mxu0 0.0
    %259 = vmatprep.subr.mxu0 0.0
    %260 = vmatpush1.msra.mxu0 0.0
    %261 = vmatprep.subr.mxu0 0.0
    %262 = vmatpush1.msra.mxu0 0.0
    %263 = vmatprep.subr.mxu0 0.0
    %264 = vmatpush1.msra.mxu0 0.0
    %265 = vmatprep.subr.mxu0 0.0
    %266 = vmatpush1.msra.mxu0 0.0
    %267 = vmatprep.subr.mxu0 0.0
    %268 = vmatpush1.msra.mxu0 0.0
    %269 = vmatprep.subr.mxu0 0.0
    %270 = vmatpush1.msra.mxu0 0.0
    %271 = vmatprep.subr.mxu0 0.0
    %272 = vmatpush1.msra.mxu0 0.0
    %273 = vmatprep.subr.mxu0 0.0
    %274 = vmatpush1.msra.mxu0 0.0
    %275 = vmatprep.subr.mxu0 0.0
    %276 = vmatpush1.msra.mxu0 0.0
    %277 = vmatprep.mubr.f32.mxu0 0.0
    %278 = vmatmul.mubr.f32.gmra.mrb[0].mxu0 %v189
    %v279 = vpop.f32.mrb[0].mxu0
    %v280 = vadd.f32 %v211, %v279
    %v281 = vpop.f32.mrb[0].mxu0
    %282 = vdwg.mxu0
    %283 = vst [vmem:[#allocation8] sm:$0x3] %v280
    // Predicated region
    $region42: #{tpu_custom_call.1} parent=1 // pred_check
      _
    $region43: #{tpu_custom_call.1} parent=1 // pred_check_branch
      %285 = sbr.rel (0) target = $region45
    $region44: #{tpu_custom_call.1} parent=1 // pred_region
      %s287 = ssub.s32 32, 32
      %288 = vsyncadd [#allocation4], %s287
      %s290 = sshll.u32 [#allocation8], 4
      %s291 = int_to_ptr.vmem [resolvable:$true] %s290
      %293 = dma.vmem_to_hbm [thread:$0]  %s291, 32, %s7, [#allocation4]
    $region45: #{tpu_custom_call.1} parent=1 // pred_fallthru
      _
    // Predicated region
    $region46: #{tpu_custom_call.1} parent=1 // pred_check
      _
    $region47: #{tpu_custom_call.1} parent=1 // pred_check_branch
      %295 = sbr.rel (0) target = $region49
    $region48: #{tpu_custom_call.1} parent=1 // pred_region
      %296 = dma.done [#allocation4], 32
    $region49: #{tpu_custom_call.1} parent=1 // pred_fallthru
      _
    %297 = vsyncpa [#allocation3], 1
    %298 = vsyncpa [#allocation6], 1
    %299 = vsyncpa [#allocation4], 1

// kernel: tpu_custom_call.1
$region0: #{tpu_custom_call.1}
  #allocation0 [shape = 'u32[]', space=smem, size = 0x4, offset = 0x4, fixed_abs, tag = 'smem constant byte address 0x4 - core index']
  #allocation1 [shape = 'u32[144,128]{1,0:T(1,128)}', space=vmem, size = 0x12000, scoped, tag = 'internal scratch']
  %s0 = inlined_call_operand.hbm [shape: f32[2,32], index: 0, kind: input, shape index: {}]
  %s1 = inlined_call_operand.hbm [shape: f32[32,128], index: 1, kind: input, shape index: {}]
  %s2 = inlined_call_operand.vmem [shape: f32[1,128], index: 2, kind: input, shape index: {}]
  %s3 = inlined_call_operand.vmem [shape: f32[1,128], index: 3, kind: input, shape index: {}]
  %s4 = inlined_call_operand.vmem [shape: f32[1,128], index: 4, kind: input, shape index: {}]
  %s5 = inlined_call_operand.hbm [shape: f32[128,128], index: 5, kind: input, shape index: {}]
  %s6 = inlined_call_operand.vmem [shape: f32[1,128], index: 6, kind: input, shape index: {}]
  %s7 = inlined_call_operand.hbm [shape: f32[2,128], index: 7, kind: output, shape index: {}]
  %s8 = sld [smem:[#allocation0]]
  $region50: #{tpu_custom_call.1} parent=0
    _
  %s10 = ssub.s32 1, %s8
  %s11 = scalar_select 0, %s10, %s8
  $region1: #{tpu_custom_call.1} parent=0
    #allocation2 [shape = 'u8[1024]{0}', space=vmem, size = 0x400, scoped, tag = 'input window, operand 0, single buffered']
    #allocation3 [shape = 's32[1]{0}', space=sflag, size = 0x4, scoped, tag = 'scoped memory for tpu_custom_call.1']
    #allocation4 [shape = 's32[1]{0}', space=sflag, size = 0x4, scoped, tag = 'scoped memory for tpu_custom_call.1']
    #allocation5 [shape = 'u8[16384]{0}', space=vmem, size = 0x4000, scoped, tag = 'input window, operand 1, single buffered']
    #allocation6 [shape = 's32[1]{0}', space=sflag, size = 0x4, scoped, tag = 'scoped memory for tpu_custom_call.1']
    #allocation7 [shape = 'u8[65536]{0}', space=vmem, size = 0x10000, scoped, tag = 'input window, operand 5, single buffered']
    #allocation8 [shape = 'u8[1024]{0}', space=vmem, size = 0x400, scoped, tag = 'output window, operand 0, single buffered']
    %12 = vsyncpa [#allocation3], 0
    %13 = vsyncpa [#allocation6], 0
    %14 = vsyncpa [#allocation4], 0
    // Predicated region
    $region2: #{tpu_custom_call.1} parent=1 // pred_check
      _
    $region3: #{tpu_custom_call.1} parent=1 // pred_check_branch
      %16 = sbr.rel (0) target = $region5
    $region4: #{tpu_custom_call.1} parent=1 // pred_region
      %s18 = ssub.s32 32, 32
      %19 = vsyncadd [#allocation3], %s18
      %s21 = sshll.u32 [#allocation2], 4
      %s22 = int_to_ptr.vmem [resolvable:$true] %s21
      %24 = dma.hbm_to_vmem [thread:$0]  %s0, 32, %s22, [#allocation3]
    $region5: #{tpu_custom_call.1} parent=1 // pred_fallthru
      _
    // Predicated region
    $region6: #{tpu_custom_call.1} parent=1 // pred_check
      _
    $region7: #{tpu_custom_call.1} parent=1 // pred_check_branch
      %26 = sbr.rel (0) target = $region9
    $region8: #{tpu_custom_call.1} parent=1 // pred_region
      %s28 = ssub.s32 512, 512
      %29 = vsyncadd [#allocation6], %s28
      %s30 = sshll.u32 [#allocation5], 4
      %s31 = int_to_ptr.vmem [resolvable:$true] %s30
      %36 = dma.hbm_to_vmem [thread:$0]  %s1, 512, %s31, [#allocation6], 128, 128, 8
    $region9: #{tpu_custom_call.1} parent=1 // pred_fallthru
      _
    // Predicated region
    $region10: #{tpu_custom_call.1} parent=1 // pred_check
      _
    $region11: #{tpu_custom_call.1} parent=1 // pred_check_branch
      %38 = sbr.rel (0) target = $region13
    $region12: #{tpu_custom_call.1} parent=1 // pred_region
      _
    $region13: #{tpu_custom_call.1} parent=1 // pred_fallthru
      _
    // Predicated region
    $region14: #{tpu_custom_call.1} parent=1 // pred_check
      _
    $region15: #{tpu_custom_call.1} parent=1 // pred_check_branch
      %40 = sbr.rel (0) target = $region17
    $region16: #{tpu_custom_call.1} parent=1 // pred_region
      _
    $region17: #{tpu_custom_call.1} parent=1 // pred_fallthru
      _
    // Predicated region
    $region18: #{tpu_custom_call.1} parent=1 // pred_check
      _
    $region19: #{tpu_custom_call.1} parent=1 // pred_check_branch
      %42 = sbr.rel (0) target = $region21
    $region20: #{tpu_custom_call.1} parent=1 // pred_region
      _
    $region21: #{tpu_custom_call.1} parent=1 // pred_fallthru
      _
    // Predicated region
    $region22: #{tpu_custom_call.1} parent=1 // pred_check
      _
    $region23: #{tpu_custom_call.1} parent=1 // pred_check_branch
      %44 = sbr.rel (0) target = $region25
    $region24: #{tpu_custom_call.1} parent=1 // pred_region
      %s46 = ssub.s32 2048, 2048
      %47 = vsyncadd [#allocation6], %s46
      %s48 = sshll.u32 [#allocation7], 4
      %s49 = int_to_ptr.vmem [resolvable:$true] %s48
      %54 = dma.hbm_to_vmem [thread:$0]  %s5, 2048, %s49, [#allocation6], 128, 128, 8
    $region25: #{tpu_custom_call.1} parent=1 // pred_fallthru
      _
    // Predicated region
    $region26: #{tpu_custom_call.1} parent=1 // pred_check
      _
    $region27: #{tpu_custom_call.1} parent=1 // pred_check_branch
      %56 = sbr.rel (0) target = $region29
    $region28: #{tpu_custom_call.1} parent=1 // pred_region
      _
    $region29: #{tpu_custom_call.1} parent=1 // pred_fallthru
      _
    // Predicated region
    $region30: #{tpu_custom_call.1} parent=1 // pred_check
      _
    $region31: #{tpu_custom_call.1} parent=1 // pred_check_branch
      %58 = sbr.rel (0) target = $region33
    $region32: #{tpu_custom_call.1} parent=1 // pred_region
      %59 = dma.done [#allocation3], 32
    $region33: #{tpu_custom_call.1} parent=1 // pred_fallthru
      _
    // Predicated region
    $region34: #{tpu_custom_call.1} parent=1 // pred_check
      _
    $region35: #{tpu_custom_call.1} parent=1 // pred_check_branch
      %61 = sbr.rel (0) target = $region37
    $region36: #{tpu_custom_call.1} parent=1 // pred_region
      %62 = dma.done [#allocation6], 512
    $region37: #{tpu_custom_call.1} parent=1 // pred_fallthru
      _
    // Predicated region
    $region38: #{tpu_custom_call.1} parent=1 // pred_check
      _
    $region39: #{tpu_custom_call.1} parent=1 // pred_check_branch
      %64 = sbr.rel (0) target = $region41
    $region40: #{tpu_custom_call.1} parent=1 // pred_region
      %65 = dma.done [#allocation6], 2048
    $region41: #{tpu_custom_call.1} parent=1 // pred_fallthru
      _
    %v66 = vld [vmem:[#allocation2] sm:$0x3]
    %v67 = vld [vmem:[#allocation5] sm:$0xff]
    %v68 = vld [vmem:[#allocation5 + $0x8] sm:$0xff]
    %v69 = vld [vmem:[#allocation5 + $0x10] sm:$0xff]
    %v70 = vld [vmem:[#allocation5 + $0x18] sm:$0xff]
    %v71 = vld [vmem:[%s2] sm:$0x1]
    %v73 = vlaneseq
    %v74 = vshrl.u32 %v73, 7
    %v75 = vsub.s32 0, %v74
    %v76 = vrot.slane %v71, %v75
    %vm78 = vcmask 261120
    %v80 = vsel %vm78, %v66, 0
    %82 = vmatprep.subr.mxu0 0.0
    %83 = vmatpush1.msra.mxu0 %v67
    %84 = vmatprep.subr.mxu0 0.0
    %85 = vmatpush1.msra.mxu0 %v68
    %86 = vmatprep.subr.mxu0 0.0
    %87 = vmatpush1.msra.mxu0 %v69
    %88 = vmatprep.subr.mxu0 0.0
    %89 = vmatpush1.msra.mxu0 %v70
    %90 = vmatprep.subr.mxu0 0.0
    %91 = vmatpush1.msra.mxu0 0.0
    %92 = vmatprep.subr.mxu0 0.0
    %93 = vmatpush1.msra.mxu0 0.0
    %94 = vmatprep.subr.mxu0 0.0
    %95 = vmatpush1.msra.mxu0 0.0
    %96 = vmatprep.subr.mxu0 0.0
    %97 = vmatpush1.msra.mxu0 0.0
    %98 = vmatprep.subr.mxu0 0.0
    %99 = vmatpush1.msra.mxu0 0.0
    %100 = vmatprep.subr.mxu0 0.0
    %101 = vmatpush1.msra.mxu0 0.0
    %102 = vmatprep.subr.mxu0 0.0
    %103 = vmatpush1.msra.mxu0 0.0
    %104 = vmatprep.subr.mxu0 0.0
    %105 = vmatpush1.msra.mxu0 0.0
    %106 = vmatprep.subr.mxu0 0.0
    %107 = vmatpush1.msra.mxu0 0.0
    %108 = vmatprep.subr.mxu0 0.0
    %109 = vmatpush1.msra.mxu0 0.0
    %110 = vmatprep.subr.mxu0 0.0
    %111 = vmatpush1.msra.mxu0 0.0
    %112 = vmatprep.subr.mxu0 0.0
    %113 = vmatpush1.msra.mxu0 0.0
    %114 = vmatprep.subr.mxu0 0.0
    %115 = vmatpush1.msra.mxu0 0.0
    %116 = vmatprep.subr.mxu0 0.0
    %117 = vmatpush1.msra.mxu0 0.0
    %118 = vmatprep.subr.mxu0 0.0
    %119 = vmatpush1.msra.mxu0 0.0
    %120 = vmatprep.subr.mxu0 0.0
    %121 = vmatpush1.msra.mxu0 0.0
    %122 = vmatprep.subr.mxu0 0.0
    %123 = vmatpush1.msra.mxu0 0.0
    %124 = vmatprep.subr.mxu0 0.0
    %125 = vmatpush1.msra.mxu0 0.0
    %126 = vmatprep.subr.mxu0 0.0
    %127 = vmatpush1.msra.mxu0 0.0
    %128 = vmatprep.subr.mxu0 0.0
    %129 = vmatpush1.msra.mxu0 0.0
    %130 = vmatprep.subr.mxu0 0.0
    %131 = vmatpush1.msra.mxu0 0.0
    %132 = vmatprep.subr.mxu0 0.0
    %133 = vmatpush1.msra.mxu0 0.0
    %134 = vmatprep.subr.mxu0 0.0
    %135 = vmatpush1.msra.mxu0 0.0
    %136 = vmatprep.subr.mxu0 0.0
    %137 = vmatpush1.msra.mxu0 0.0
    %138 = vmatprep.subr.mxu0 0.0
    %139 = vmatpush1.msra.mxu0 0.0
    %140 = vmatprep.subr.mxu0 0.0
    %141 = vmatpush1.msra.mxu0 0.0
    %142 = vmatprep.subr.mxu0 0.0
    %143 = vmatpush1.msra.mxu0 0.0
    %144 = vmatprep.subr.mxu0 0.0
    %145 = vmatpush1.msra.mxu0 0.0
    %146 = vmatprep.mubr.f32.mxu0 0.0
    %147 = vmatmul.mubr.f32.gmra.mrb[0].mxu0 %v80
    %v148 = vpop.f32.mrb[0].mxu0
    %v149 = vadd.f32 %v76, %v148
    %v150 = vpop.f32.mrb[0].mxu0
    %151 = vdwg.mxu0
    %vm152 = vcmask 1041408
    %v153 = vsel %vm152, %v149, 0.0
    %154 = vadd.xlane.f32.xlu0 %v153
    %v155 = vpop.xlane.xlu0 %154
    %v156 = vmul.f32 %v155, 0.03125
    %v157 = vmul.f32 %v149, %v149
    %v158 = vsel %vm152, %v157, 0.0
    %159 = vadd.xlane.f32.xlu0 %v158
    %v160 = vpop.xlane.xlu0 %159
    %v161 = vmul.f32 %v160, 0.03125
    %v162 = vmul.f32 %v156, %v156
    %v163 = vsub.f32 %v161, %v162
    %v164 = vmax.f32 %v163, 0.0
    %v165 = vsub.f32 %v149, %v156
    %v166 = vadd.f32 %v164, 1e-05
    %v167 = vrsqrt.pop %v166
    %v168 = vmul.f32 %v165, %v167
    %v169 = vld [vmem:[%s3] sm:$0x1]
    %v171 = vlaneseq
    %v172 = vshrl.u32 %v171, 7
    %v173 = vsub.s32 0, %v172
    %v174 = vrot.slane %v169, %v173
    %v176 = vmul.f32 %v168, %v174
    %v177 = vld [vmem:[%s4] sm:$0x1]
    %v179 = vlaneseq
    %v180 = vshrl.u32 %v179, 7
    %v181 = vsub.s32 0, %v180
    %v182 = vrot.slane %v177, %v181
    %v184 = vadd.f32 %v176, %v182
    %v185 = vmul.f32 %v184, 0.5
    %v186 = vmul.f32 %v184, 0.70710677
    %v187 = verf.f32.pop %v186
    %v188 = vadd.f32 %v187, 1.0
    %v189 = vmul.f32 %v185, %v188
    %v190 = vld [vmem:[#allocation7] sm:$0xff]
    %v191 = vld [vmem:[#allocation7 + $0x8] sm:$0xff]
    %v192 = vld [vmem:[#allocation7 + $0x10] sm:$0xff]
    %v193 = vld [vmem:[#allocation7 + $0x18] sm:$0xff]
    %v194 = vld [vmem:[#allocation7 + $0x20] sm:$0xff]
    %v195 = vld [vmem:[#allocation7 + $0x28] sm:$0xff]
    %v196 = vld [vmem:[#allocation7 + $0x30] sm:$0xff]
    %v197 = vld [vmem:[#allocation7 + $0x38] sm:$0xff]
    %v198 = vld [vmem:[#allocation7 + $0x40] sm:$0xff]
    %v199 = vld [vmem:[#allocation7 + $0x48] sm:$0xff]
    %v200 = vld [vmem:[#allocation7 + $0x50] sm:$0xff]
    %v201 = vld [vmem:[#allocation7 + $0x58] sm:$0xff]
    %v202 = vld [vmem:[#allocation7 + $0x60] sm:$0xff]
    %v203 = vld [vmem:[#allocation7 + $0x68] sm:$0xff]
    %v204 = vld [vmem:[#allocation7 + $0x70] sm:$0xff]
    %v205 = vld [vmem:[#allocation7 + $0x78] sm:$0xff]
    %v206 = vld [vmem:[%s6] sm:$0x1]
    %v208 = vlaneseq
    %v209 = vshrl.u32 %v208, 7
    %v210 = vsub.s32 0, %v209
    %v211 = vrot.slane %v206, %v210
    %213 = vmatprep.subr.mxu0 0.0
    %214 = vmatpush1.msra.mxu0 %v190
    %215 = vmatprep.subr.mxu0 0.0
    %216 = vmatpush1.msra.mxu0 %v191
    %217 = vmatprep.subr.mxu0 0.0
    %218 = vmatpush1.msra.mxu0 %v192
    %219 = vmatprep.subr.mxu0 0.0
    %220 = vmatpush1.msra.mxu0 %v193
    %221 = vmatprep.subr.mxu0 0.0
    %222 = vmatpush1.msra.mxu0 %v194
    %223 = vmatprep.subr.mxu0 0.0
    %224 = vmatpush1.msra.mxu0 %v195
    %225 = vmatprep.subr.mxu0 0.0
    %226 = vmatpush1.msra.mxu0 %v196
    %227 = vmatprep.subr.mxu0 0.0
    %228 = vmatpush1.msra.mxu0 %v197
    %229 = vmatprep.subr.mxu0 0.0
    %230 = vmatpush1.msra.mxu0 %v198
    %231 = vmatprep.subr.mxu0 0.0
    %232 = vmatpush1.msra.mxu0 %v199
    %233 = vmatprep.subr.mxu0 0.0
    %234 = vmatpush1.msra.mxu0 %v200
    %235 = vmatprep.subr.mxu0 0.0
    %236 = vmatpush1.msra.mxu0 %v201
    %237 = vmatprep.subr.mxu0 0.0
    %238 = vmatpush1.msra.mxu0 %v202
    %239 = vmatprep.subr.mxu0 0.0
    %240 = vmatpush1.msra.mxu0 %v203
    %241 = vmatprep.subr.mxu0 0.0
    %242 = vmatpush1.msra.mxu0 %v204
    %243 = vmatprep.subr.mxu0 0.0
    %244 = vmatpush1.msra.mxu0 %v205
    %245 = vmatprep.subr.mxu0 0.0
    %246 = vmatpush1.msra.mxu0 0.0
    %247 = vmatprep.subr.mxu0 0.0
    %248 = vmatpush1.msra.mxu0 0.0
    %249 = vmatprep.subr.mxu0 0.0
    %250 = vmatpush1.msra.mxu0 0.0
    %251 = vmatprep.subr.mxu0 0.0
    %252 = vmatpush1.msra.mxu0 0.0
    %253 = vmatprep.subr.mxu0 0.0
    %254 = vmatpush1.msra.mxu0 0.0
    %255 = vmatprep.subr.mxu0 0.0
    %256 = vmatpush1.msra.mxu0 0.0
    %257 = vmatprep.subr.mxu0 0.0
    %258 = vmatpush1.msra.mxu0 0.0
    %259 = vmatprep.subr.mxu0 0.0
    %260 = vmatpush1.msra.mxu0 0.0
    %261 = vmatprep.subr.mxu0 0.0
    %262 = vmatpush1.msra.mxu0 0.0
    %263 = vmatprep.subr.mxu0 0.0
    %264 = vmatpush1.msra.mxu0 0.0
    %265 = vmatprep.subr.mxu0 0.0
    %266 = vmatpush1.msra.mxu0 0.0
    %267 = vmatprep.subr.mxu0 0.0
    %268 = vmatpush1.msra.mxu0 0.0
    %269 = vmatprep.subr.mxu0 0.0
    %270 = vmatpush1.msra.mxu0 0.0
    %271 = vmatprep.subr.mxu0 0.0
    %272 = vmatpush1.msra.mxu0 0.0
    %273 = vmatprep.subr.mxu0 0.0
    %274 = vmatpush1.msra.mxu0 0.0
    %275 = vmatprep.subr.mxu0 0.0
    %276 = vmatpush1.msra.mxu0 0.0
    %277 = vmatprep.mubr.f32.mxu0 0.0
    %278 = vmatmul.mubr.f32.gmra.mrb[0].mxu0 %v189
    %v279 = vpop.f32.mrb[0].mxu0
    %v280 = vadd.f32 %v211, %v279
    %v281 = vpop.f32.mrb[0].mxu0
    %282 = vdwg.mxu0
    %283 = vst [vmem:[#allocation8] sm:$0x3] %v280
    // Predicated region
    $region42: #{tpu_custom_call.1} parent=1 // pred_check
      _
    $region43: #{tpu_custom_call.1} parent=1 // pred_check_branch
      %285 = sbr.rel (0) target = $region45
    $region44: #{tpu_custom_call.1} parent=1 // pred_region
      %s287 = ssub.s32 32, 32
      %288 = vsyncadd [#allocation4], %s287
      %s290 = sshll.u32 [#allocation8], 4
      %s291 = int_to_ptr.vmem [resolvable:$true] %s290
      %293 = dma.vmem_to_hbm [thread:$0]  %s291, 32, %s7, [#allocation4]
    $region45: #{tpu_custom_call.1} parent=1 // pred_fallthru
      _
    // Predicated region
    $region46: #{tpu_custom_call.1} parent=1 // pred_check
      _
    $region47: #{tpu_custom_call.1} parent=1 // pred_check_branch
      %295 = sbr.rel (0) target = $region49
    $region48: #{tpu_custom_call.1} parent=1 // pred_region
      %296 = dma.done [#allocation4], 32
    $region49: #{tpu_custom_call.1} parent=1 // pred_fallthru
      _
    %297 = vsyncpa [#allocation3], 1
    %298 = vsyncpa [#allocation6], 1
    %299 = vsyncpa [#allocation4], 1

</llo_original>
